<compile_context>
chip_gen: v6e
topology: v6e:2x2x1
jax: 0.10.0
libtpu: 0.0.40
codegen_flags: <defaults>
</compile_context>

<pallas_src>
import jax
import jax.numpy as jnp
import numpy as np
from jax.experimental import pallas as pl
from jax.experimental.pallas import tpu as pltpu

PAD_ID, UNK_ID, EOS_ID, BOS_ID, SEP_ID, MASK_ID = 0, 1, 2, 3, 4, 5
VOCAB_SIZE = 64


def _round_up(x, m):
    return -(-x // m) * m


def _round_down(x, m):
    return (x // m) * m


def _tokenize_pad_kernel(ids_ref, len_ref, out_ids_ref, out_mask_ref):
    """OOV->unk, place [<bos>, tokens..., <eos>], pad with <pad>, build mask.

    ids_ref      : VMEM int32[TB, L_work]  raw ids shifted right by one column
                   (column 0 is a dummy; <bos> is produced in-kernel),
                   zero-padded to the 128-multiple L_work.
    len_ref      : VMEM int32[TB, 1]       true raw sequence lengths
    out_ids_ref  : VMEM int32[TB, ML]
    out_mask_ref : VMEM int8 [TB, ML]
    """
    TB, ML = out_ids_ref.shape
    L_work = ids_ref.shape[1]            # round_up(L_raw + 2, 128) <= ML

    # ---- static tail [L_work, ML): always <pad> / mask 0, pure constant fill
    # (PAD_ID == 0, so zeros is the cheapest constant store). Lane-dense:
    # both L_work and ML are multiples of 128.
    if ML > L_work:
        out_ids_ref[:, L_work:] = jnp.zeros((TB, ML - L_work), jnp.int32)
        out_mask_ref[:, L_work:] = jnp.zeros((TB, ML - L_work), jnp.int8)

    # ---- data-dependent narrow window [0, L_work) only
    ids = ids_ref[...]                                    # (TB, L_work) int32
    # convert_tokens_to_ids fallback: anything outside the vocab -> <unk>.
    # Single unsigned compare catches both negative ids and ids >= vocab_size.
    oov = ids.astype(jnp.uint32) >= jnp.uint32(VOCAB_SIZE)
    ids = jnp.where(oov, UNK_ID, ids)

    lens = jnp.minimum(len_ref[...], L_work - 2)          # (TB, 1) guard
    pos = jax.lax.broadcasted_iota(jnp.int32, (TB, L_work), 1)

    # pos 0 -> <bos>; 1..len -> tokens (input already shifted by one column);
    # len+1 -> <eos>; rest of the window -> <pad>.
    toks = jnp.where(
        pos == 0, BOS_ID,
        jnp.where(pos <= lens, ids,
                  jnp.where(pos == lens + 1, EOS_ID, PAD_ID)))
    out_ids_ref[:, 0:L_work] = toks
    out_mask_ref[:, 0:L_work] = (pos < lens + 2).astype(jnp.int8)


def tokenizer_forward(raw_ids, lengths, max_length, *, block_b=256):
    """Pallas equivalent of tokenizer(..., padding='max_length',
    add_special_tokens=True, truncation=False) on already-integer id sequences.

    raw_ids : int32 [B, L_raw]  zero-padded raw token ids
    lengths : int32 [B]         true lengths (each <= L_raw <= max_length - 2)
    returns (input_ids int32 [B, max_length], attention_mask int8 [B, max_length])
    """
    B, L_raw = raw_ids.shape
    if max_length % 128 != 0:
        raise ValueError("max_length must be a multiple of 128 (lane-dense stores)")
    if max_length < L_raw + 2:
        raise ValueError("no truncation path: need max_length >= L_raw + 2")

    # Data-dependent lane window, 128-aligned so loads/stores are lane-dense.
    L_work = _round_up(L_raw + 2, 128)           # <= max_length by the checks above

    # Batch tile: multiple of 32 (dense int8 mask tiles); default 256 keeps the
    # double-buffered in/out working set ~5 MiB at max_length=2048, well inside
    # v5e's 16 MiB scoped-VMEM default and v7x's tighter budget; when B allows,
    # cap tb so there are >= 2 grid steps to shard across v7x's 2 TensorCores.
    tb = min(block_b, _round_up(B, 32))
    if B >= 64:
        tb = min(tb, max(32, _round_down(B // 2, 32)))
    tb = max(32, _round_down(tb, 32))
    n_blk = -(-B // tb)
    b_pad = n_blk * tb

    # Single host-side pad per array: batch pad + 1-column left shift (the
    # <bos> slot; filled in-kernel) + width pad to L_work, all with 0 == <pad>.
    ids_in = jnp.pad(raw_ids.astype(jnp.int32),
                     ((0, b_pad - B), (1, L_work - 1 - L_raw)))
    lens_in = jnp.pad(lengths.astype(jnp.int32).reshape(B, 1),
                      ((0, b_pad - B), (0, 0)))

    bytes_accessed = (b_pad * L_work * 4          # ids in
                      + b_pad * 4                 # lens in
                      + b_pad * max_length * 4    # ids out
                      + b_pad * max_length * 1)   # mask out

    out_ids, out_mask = pl.pallas_call(
        _tokenize_pad_kernel,
        out_shape=(jax.ShapeDtypeStruct((b_pad, max_length), jnp.int32),
                   jax.ShapeDtypeStruct((b_pad, max_length), jnp.int8)),
        grid_spec=pltpu.PrefetchScalarGridSpec(
            num_scalar_prefetch=0,
            grid=(n_blk,),
            in_specs=[
                pl.BlockSpec((tb, L_work), lambda b: (b, 0)),
                pl.BlockSpec((tb, 1), lambda b: (b, 0)),
            ],
            out_specs=[
                pl.BlockSpec((tb, max_length), lambda b: (b, 0)),
                pl.BlockSpec((tb, max_length), lambda b: (b, 0)),
            ],
        ),
        compiler_params=pltpu.CompilerParams(
            dimension_semantics=("parallel",)),   # shards batch across v7x's 2 TCs
        cost_estimate=pl.CostEstimate(flops=0, transcendentals=0,
                                      bytes_accessed=bytes_accessed),
    )(ids_in, lens_in)

    if b_pad != B:
        out_ids, out_mask = out_ids[:B], out_mask[:B]
    return out_ids, out_mask


def _reference(raw_ids, lengths, max_length):
    raw_ids = np.asarray(raw_ids)
    lengths = np.asarray(lengths)
    B, _ = raw_ids.shape
    out = np.full((B, max_length), PAD_ID, np.int32)
    mask = np.zeros((B, max_length), np.int8)
    for b in range(B):
        n = int(lengths[b])
        seq = raw_ids[b, :n].astype(np.int64).copy()
        seq[(seq < 0) | (seq >= VOCAB_SIZE)] = UNK_ID
        full = [BOS_ID] + list(seq) + [EOS_ID]
        out[b, :len(full)] = full
        mask[b, :len(full)] = 1
    return out, mask


if __name__ == "__main__":
    key = jax.random.PRNGKey(0)
    k_ids, k_len = jax.random.split(key)

    B = 8          # batch of sequences
    L_RAW = 16     # max raw (pre-special-token) length
    MAX_LEN = 256  # padded output length (multiple of 128 lanes; > L_work
                   # so the constant-tail path is exercised too)

    # Raw ids in [6, VOCAB_SIZE + 20): includes some out-of-vocab ids -> <unk>.
    raw_ids = jax.random.randint(k_ids, (B, L_RAW), 6, VOCAB_SIZE + 20,
                                 dtype=jnp.int32)
    raw_ids = raw_ids.at[0, 0].set(-7)   # exercise the negative-id -> <unk> path
    lengths = jax.random.randint(k_len, (B,), 1, L_RAW + 1, dtype=jnp.int32)

    input_ids, attn_mask = tokenizer_forward(raw_ids, lengths, MAX_LEN)
    jax.block_until_ready((input_ids, attn_mask))

    ref_ids, ref_mask = _reference(raw_ids, lengths, MAX_LEN)
    assert input_ids.shape == (B, MAX_LEN) and input_ids.dtype == jnp.int32
    assert attn_mask.shape == (B, MAX_LEN) and attn_mask.dtype == jnp.int8
    np.testing.assert_array_equal(np.asarray(input_ids), ref_ids)
    np.testing.assert_array_equal(np.asarray(attn_mask), ref_mask)

    print("KERNEL_OK")
</pallas_src>

<mosaic_0001>
module attributes {stable_mosaic.version = 11 : i64} {
  func.func @_tokenize_pad_kernel(%arg0: i32, %arg1: memref<32x128xi32, #tpu.memory_space<vmem>>, %arg2: memref<32x1xi32, #tpu.memory_space<vmem>>, %arg3: memref<32x256xi32, #tpu.memory_space<vmem>>, %arg4: memref<32x256xi8, #tpu.memory_space<vmem>>) attributes {dimension_semantics = [#tpu.dimension_semantics<parallel>], iteration_bounds = array<i64: 1>, scalar_prefetch = 0 : i64, scratch_operands = 0 : i64, tpu.core_type = #tpu.core_type<tc>, window_params = [{transform_indices = @transform_0, window_bounds = array<i64: 32, 128>}, {transform_indices = @transform_1, window_bounds = array<i64: 32, 1>}, {transform_indices = @transform_2, window_bounds = array<i64: 32, 256>}, {transform_indices = @transform_3, window_bounds = array<i64: 32, 256>}]} {
    %c0_i32 = arith.constant 0 : i32
    %0 = vector.broadcast %c0_i32 : i32 to vector<32x128xi32>
    %c0 = arith.constant 0 : index
    %c128 = arith.constant 128 : index
    %1 = vector.load %arg3[%c0, %c128] : memref<32x256xi32, #tpu.memory_space<vmem>>, vector<32x128xi32>
    tpu.vector_store %arg3[%c0, %c128], %0 {strides = array<i32>} : memref<32x256xi32, #tpu.memory_space<vmem>>, vector<32x128xi32>,
    %c0_i8 = arith.constant 0 : i8
    %2 = vector.broadcast %c0_i8 : i8 to vector<32x128xi8>
    %c0_0 = arith.constant 0 : index
    %c128_1 = arith.constant 128 : index
    %3 = vector.load %arg4[%c0_0, %c128_1] : memref<32x256xi8, #tpu.memory_space<vmem>>, vector<32x128xi8>
    tpu.vector_store %arg4[%c0_0, %c128_1], %2 {strides = array<i32>} : memref<32x256xi8, #tpu.memory_space<vmem>>, vector<32x128xi8>,
    %c0_2 = arith.constant 0 : index
    %c0_3 = arith.constant 0 : index
    %4 = vector.load %arg1[%c0_2, %c0_3] : memref<32x128xi32, #tpu.memory_space<vmem>>, vector<32x128xi32>
    %c64_i32 = arith.constant 64 : i32
    %5 = vector.broadcast %c64_i32 : i32 to vector<32x128xi32>
    %6 = arith.cmpi uge, %4, %5 : vector<32x128xi32>
    %c1_i32 = arith.constant 1 : i32
    %7 = vector.broadcast %c1_i32 : i32 to vector<32x128xi32>
    %8 = arith.select %6, %7, %4 : vector<32x128xi1>, vector<32x128xi32>
    %c0_4 = arith.constant 0 : index
    %c0_5 = arith.constant 0 : index
    %9 = vector.load %arg2[%c0_4, %c0_5] : memref<32x1xi32, #tpu.memory_space<vmem>>, vector<32x1xi32>
    %c126_i32 = arith.constant 126 : i32
    %10 = vector.broadcast %c126_i32 : i32 to vector<32x1xi32>
    %11 = arith.minsi %9, %10 : vector<32x1xi32>
    %12 = tpu.iota {dimensions = array<i32: 1>} : vector<32x128xi32>
    %c0_i32_6 = arith.constant 0 : i32
    %13 = vector.broadcast %c0_i32_6 : i32 to vector<32x128xi32>
    %14 = arith.cmpi eq, %12, %13 : vector<32x128xi32>
    %15 = vector.broadcast %11 : vector<32x1xi32> to vector<32x128xi32>
    %16 = arith.cmpi sle, %12, %15 : vector<32x128xi32>
    %c1_i32_7 = arith.constant 1 : i32
    %17 = vector.broadcast %c1_i32_7 : i32 to vector<32x1xi32>
    %18 = arith.addi %11, %17 : vector<32x1xi32>
    %19 = vector.broadcast %18 : vector<32x1xi32> to vector<32x128xi32>
    %20 = arith.cmpi eq, %12, %19 : vector<32x128xi32>
    %c2_i32 = arith.constant 2 : i32
    %c0_i32_8 = arith.constant 0 : i32
    %21 = vector.broadcast %c2_i32 : i32 to vector<32x128xi32>
    %22 = vector.broadcast %c0_i32_8 : i32 to vector<32x128xi32>
    %23 = arith.select %20, %21, %22 : vector<32x128xi1>, vector<32x128xi32>
    %24 = arith.select %16, %8, %23 : vector<32x128xi1>, vector<32x128xi32>
    %c3_i32 = arith.constant 3 : i32
    %25 = vector.broadcast %c3_i32 : i32 to vector<32x128xi32>
    %26 = arith.select %14, %25, %24 : vector<32x128xi1>, vector<32x128xi32>
    %c0_9 = arith.constant 0 : index
    %c0_10 = arith.constant 0 : index
    %27 = vector.load %arg3[%c0_9, %c0_10] : memref<32x256xi32, #tpu.memory_space<vmem>>, vector<32x128xi32>
    tpu.vector_store %arg3[%c0_9, %c0_10], %26 {strides = array<i32>} : memref<32x256xi32, #tpu.memory_space<vmem>>, vector<32x128xi32>,
    %c2_i32_11 = arith.constant 2 : i32
    %28 = vector.broadcast %c2_i32_11 : i32 to vector<32x1xi32>
    %29 = arith.addi %11, %28 : vector<32x1xi32>
    %30 = vector.broadcast %29 : vector<32x1xi32> to vector<32x128xi32>
    %31 = arith.cmpi slt, %12, %30 : vector<32x128xi32>
    %32 = arith.extui %31 : vector<32x128xi1> to vector<32x128xi8>
    %c0_12 = arith.constant 0 : index
    %c0_13 = arith.constant 0 : index
    %33 = vector.load %arg4[%c0_12, %c0_13] : memref<32x256xi8, #tpu.memory_space<vmem>>, vector<32x128xi8>
    tpu.vector_store %arg4[%c0_12, %c0_13], %32 {strides = array<i32>} : memref<32x256xi8, #tpu.memory_space<vmem>>, vector<32x128xi8>,
    return
  }
  func.func @transform_0(%arg0: i32) -> (i32, i32) {
    %c0_i32 = arith.constant 0 : i32
    %c0_i32_0 = arith.constant 0 : i32
    return %arg0, %c0_i32 : i32, i32
  }
  func.func @transform_1(%arg0: i32) -> (i32, i32) {
    %c0_i32 = arith.constant 0 : i32
    %c0_i32_0 = arith.constant 0 : i32
    return %arg0, %c0_i32 : i32, i32
  }
  func.func @transform_2(%arg0: i32) -> (i32, i32) {
    %c0_i32 = arith.constant 0 : i32
    %c0_i32_0 = arith.constant 0 : i32
    return %arg0, %c0_i32 : i32, i32
  }
  func.func @transform_3(%arg0: i32) -> (i32, i32) {
    %c0_i32 = arith.constant 0 : i32
    %c0_i32_0 = arith.constant 0 : i32
    return %arg0, %c0_i32 : i32, i32
  }
}

</mosaic_0001>

<llo_original>
// kernel: tpu_custom_call.1
$region0: #{tpu_custom_call.1}
  #allocation0 [shape = 'u32[]', space=smem, size = 0x4, offset = 0x4, fixed_abs, tag = 'smem constant byte address 0x4 - core index']
  #allocation1 [shape = 'u32[144,128]{1,0:T(1,128)}', space=vmem, size = 0x12000, scoped, tag = 'internal scratch']
  %s0 = inlined_call_operand.vmem [shape: s32[32,128], index: 0, kind: input, shape index: {}]
  %s1 = inlined_call_operand.vmem [shape: s32[32,1], index: 1, kind: input, shape index: {}]
  %s2 = inlined_call_operand.hbm [shape: s32[32,256], index: 2, kind: output, shape index: {0}]
  %s3 = inlined_call_operand.hbm [shape: s8[32,256], index: 3, kind: output, shape index: {1}]
  %4 = xla_tuple %s2, %s3
  %s5 = sld [smem:[#allocation0]]
  $region26: #{tpu_custom_call.1} parent=0
    _
  %s7 = ssub.s32 1, %s5
  %s8 = scalar_select 0, %s7, %s5
  $region1: #{tpu_custom_call.1} parent=0
    #allocation2 [shape = 'u8[32768]{0}', space=vmem, size = 0x8000, scoped, tag = 'output window, operand 0, single buffered']
    #allocation3 [shape = 's32[1]{0}', space=sflag, size = 0x4, scoped, tag = 'scoped memory for tpu_custom_call.1']
    #allocation4 [shape = 'u8[8192]{0}', space=vmem, size = 0x2000, scoped, tag = 'output window, operand 1, single buffered']
    #allocation5 [shape = 's32[1]{0}', space=sflag, size = 0x4, scoped, tag = 'scoped memory for tpu_custom_call.1']
    %9 = vsyncpa [#allocation3], 0
    %10 = vsyncpa [#allocation5], 0
    // Predicated region
    $region2: #{tpu_custom_call.1} parent=1 // pred_check
      _
    $region3: #{tpu_custom_call.1} parent=1 // pred_check_branch
      %12 = sbr.rel (0) target = $region5
    $region4: #{tpu_custom_call.1} parent=1 // pred_region
      _
    $region5: #{tpu_custom_call.1} parent=1 // pred_fallthru
      _
    // Predicated region
    $region6: #{tpu_custom_call.1} parent=1 // pred_check
      _
    $region7: #{tpu_custom_call.1} parent=1 // pred_check_branch
      %14 = sbr.rel (0) target = $region9
    $region8: #{tpu_custom_call.1} parent=1 // pred_region
      _
    $region9: #{tpu_custom_call.1} parent=1 // pred_fallthru
      _
    %17 = vst [vmem:[#allocation2 + $0x8] sm:$0xff] 0
    %18 = vst [vmem:[#allocation2 + $0x18] sm:$0xff] 0
    %19 = vst [vmem:[#allocation2 + $0x28] sm:$0xff] 0
    %20 = vst [vmem:[#allocation2 + $0x38] sm:$0xff] 0
    %21 = vst [vmem:[#allocation4 + $0x8] sm:$0xff] 0
    %v22 = vld [vmem:[%s0] sm:$0xff]
    %v23 = vld [vmem:[%s0 + $0x8] sm:$0xff]
    %v24 = vld [vmem:[%s0 + $0x10] sm:$0xff]
    %v25 = vld [vmem:[%s0 + $0x18] sm:$0xff]
    %vm26 = vcmp.ge.u32.totalorder %v22, 64
    %vm27 = vcmp.ge.u32.totalorder %v23, 64
    %vm28 = vcmp.ge.u32.totalorder %v24, 64
    %vm29 = vcmp.ge.u32.totalorder %v25, 64
    %v30 = vsel %vm26, 1, %v22
    %v31 = vsel %vm27, 1, %v23
    %v32 = vsel %vm28, 1, %v24
    %v33 = vsel %vm29, 1, %v25
    %v34 = vld [vmem:[%s1] sm:$0xff]
    %v35 = vld [vmem:[%s1 + $0x8] sm:$0xff]
    %v36 = vld [vmem:[%s1 + $0x10] sm:$0xff]
    %v37 = vld [vmem:[%s1 + $0x18] sm:$0xff]
    %vm38 = vcmp.lt.s32.totalorder %v34, 126
    %v39 = vsel %vm38, %v34, 126
    %vm40 = vcmp.lt.s32.totalorder %v35, 126
    %v41 = vsel %vm40, %v35, 126
    %vm42 = vcmp.lt.s32.totalorder %v36, 126
    %v43 = vsel %vm42, %v36, 126
    %vm44 = vcmp.lt.s32.totalorder %v37, 126
    %v45 = vsel %vm44, %v37, 126
    %v46 = vlaneseq
    %v47 = vand.u32 %v46, 127
    %vm48 = vcmp.eq.s32.totalorder %v47, 0
    %49 = vset.pattern.permute.xlu0 0
    %50 = vperm.xlu0 %49, %v39
    %v51 = vpop.permute.xlu0 %50
    %52 = vset.pattern.permute.xlu0 0
    %53 = vperm.xlu0 %52, %v41
    %v54 = vpop.permute.xlu0 %53
    %55 = vset.pattern.permute.xlu0 0
    %56 = vperm.xlu0 %55, %v43
    %v57 = vpop.permute.xlu0 %56
    %58 = vset.pattern.permute.xlu0 0
    %59 = vperm.xlu0 %58, %v45
    %v60 = vpop.permute.xlu0 %59
    %vm61 = vcmp.le.s32.totalorder %v47, %v51
    %vm62 = vcmp.le.s32.totalorder %v47, %v54
    %vm63 = vcmp.le.s32.totalorder %v47, %v57
    %vm64 = vcmp.le.s32.totalorder %v47, %v60
    %v65 = vadd.s32 %v39, 1
    %v66 = vadd.s32 %v41, 1
    %v67 = vadd.s32 %v43, 1
    %v68 = vadd.s32 %v45, 1
    %69 = vset.pattern.permute.xlu0 0
    %70 = vperm.xlu0 %69, %v65
    %v71 = vpop.permute.xlu0 %70
    %72 = vset.pattern.permute.xlu0 0
    %73 = vperm.xlu0 %72, %v66
    %v74 = vpop.permute.xlu0 %73
    %75 = vset.pattern.permute.xlu0 0
    %76 = vperm.xlu0 %75, %v67
    %v77 = vpop.permute.xlu0 %76
    %78 = vset.pattern.permute.xlu0 0
    %79 = vperm.xlu0 %78, %v68
    %v80 = vpop.permute.xlu0 %79
    %vm81 = vcmp.eq.s32.totalorder %v47, %v71
    %vm82 = vcmp.eq.s32.totalorder %v47, %v74
    %vm83 = vcmp.eq.s32.totalorder %v47, %v77
    %vm84 = vcmp.eq.s32.totalorder %v47, %v80
    %v85 = vsel %vm81, 2, 0
    %v86 = vsel %vm82, 2, 0
    %v87 = vsel %vm83, 2, 0
    %v88 = vsel %vm84, 2, 0
    %v89 = vsel %vm61, %v30, %v85
    %v90 = vsel %vm62, %v31, %v86
    %v91 = vsel %vm63, %v32, %v87
    %v92 = vsel %vm64, %v33, %v88
    %v93 = vsel %vm48, 3, %v89
    %v94 = vsel %vm48, 3, %v90
    %v95 = vsel %vm48, 3, %v91
    %v96 = vsel %vm48, 3, %v92
    %97 = vst [vmem:[#allocation2] sm:$0xff] %v93
    %98 = vst [vmem:[#allocation2 + $0x10] sm:$0xff] %v94
    %99 = vst [vmem:[#allocation2 + $0x20] sm:$0xff] %v95
    %100 = vst [vmem:[#allocation2 + $0x30] sm:$0xff] %v96
    %v101 = vadd.s32 %v39, 2
    %v102 = vadd.s32 %v41, 2
    %v103 = vadd.s32 %v43, 2
    %v104 = vadd.s32 %v45, 2
    %105 = vset.pattern.permute.xlu0 0
    %106 = vperm.xlu0 %105, %v101
    %v107 = vpop.permute.xlu0 %106
    %108 = vset.pattern.permute.xlu0 0
    %109 = vperm.xlu0 %108, %v102
    %v110 = vpop.permute.xlu0 %109
    %111 = vset.pattern.permute.xlu0 0
    %112 = vperm.xlu0 %111, %v103
    %v113 = vpop.permute.xlu0 %112
    %114 = vset.pattern.permute.xlu0 0
    %115 = vperm.xlu0 %114, %v104
    %v116 = vpop.permute.xlu0 %115
    %vm117 = vcmp.lt.s32.totalorder %v47, %v107
    %vm118 = vcmp.lt.s32.totalorder %v47, %v110
    %vm119 = vcmp.lt.s32.totalorder %v47, %v113
    %vm120 = vcmp.lt.s32.totalorder %v47, %v116
    %vm121 = vmpackc.low %vm118, %vm117
    %vm122 = vmpackc.low %vm120, %vm119
    %vm123 = vmpackc.even %vm122, %vm121
    %v124 = vsel %vm123, 16843009, 0
    %125 = vst [vmem:[#allocation4] sm:$0xff] %v124
    // Predicated region
    $region10: #{tpu_custom_call.1} parent=1 // pred_check
      _
    $region11: #{tpu_custom_call.1} parent=1 // pred_check_branch
      %127 = sbr.rel (0) target = $region13
    $region12: #{tpu_custom_call.1} parent=1 // pred_region
      %s129 = ssub.s32 1024, 1024
      %130 = vsyncadd [#allocation3], %s129
      %s131 = sshll.u32 [#allocation2], 4
      %s132 = int_to_ptr.vmem [resolvable:$true] %s131
      %137 = dma.vmem_to_hbm [thread:$0]  %s132, 1024, %s2, [#allocation3], 256, 256, 16
    $region13: #{tpu_custom_call.1} parent=1 // pred_fallthru
      _
    // Predicated region
    $region14: #{tpu_custom_call.1} parent=1 // pred_check
      _
    $region15: #{tpu_custom_call.1} parent=1 // pred_check_branch
      %139 = sbr.rel (0) target = $region17
    $region16: #{tpu_custom_call.1} parent=1 // pred_region
      %s141 = ssub.s32 256, 256
      %142 = vsyncadd [#allocation5], %s141
      %s144 = sshll.u32 [#allocation4], 4
      %s145 = int_to_ptr.vmem [resolvable:$true] %s144
      %147 = dma.vmem_to_hbm [thread:$0]  %s145, 256, %s3, [#allocation5]
    $region17: #{tpu_custom_call.1} parent=1 // pred_fallthru
      _
    // Predicated region
    $region18: #{tpu_custom_call.1} parent=1 // pred_check
      _
    $region19: #{tpu_custom_call.1} parent=1 // pred_check_branch
      %149 = sbr.rel (0) target = $region21
    $region20: #{tpu_custom_call.1} parent=1 // pred_region
      %150 = dma.done [#allocation3], 1024
    $region21: #{tpu_custom_call.1} parent=1 // pred_fallthru
      _
    // Predicated region
    $region22: #{tpu_custom_call.1} parent=1 // pred_check
      _
    $region23: #{tpu_custom_call.1} parent=1 // pred_check_branch
      %152 = sbr.rel (0) target = $region25
    $region24: #{tpu_custom_call.1} parent=1 // pred_region
      %153 = dma.done [#allocation5], 256
    $region25: #{tpu_custom_call.1} parent=1 // pred_fallthru
      _
    %154 = vsyncpa [#allocation3], 1
    %155 = vsyncpa [#allocation5], 1

</llo_original>
